<compile_context>
chip_gen: v5e
topology: v5e:2x2
jax: 0.10.0
libtpu: 0.0.40
codegen_flags: <defaults>
</compile_context>

<pallas_src>
import jax
import jax.numpy as jnp
from jax.experimental import pallas as pl
from jax.experimental.pallas import tpu as pltpu


def attention_kernel(x_ref, v_ref, c_ref, o_ref):
    """One batch tile.

    x_ref: [TB, S, D]  input tile (native dtype; never promoted wholesale)
    v_ref: [D, 1]      folded projection vector  v = W^T @ representation (x.dtype)
    c_ref: [1, 1]      folded scalar  c = bias . representation (f32, SMEM)
    o_ref: [TB, D]
    """
    x = x_ref[...]
    tb, s, d = x.shape
    c = c_ref[0, 0]                                                  # f32 scalar

    # ---- score[b, s] = tanh(x[b, s, :] . v + c) ------------------------------
    if s % 8 == 0:
        # MXU mat-vec: x streams as the LHS; the tiny [D, 1] v is the stationary
        # operand.  f32 accumulation; no f32 promotion of the x tile.
        x2d = x.reshape(tb * s, d)                                   # free merge
        scores = jnp.dot(x2d, v_ref[...],
                         preferred_element_type=jnp.float32)         # [TB*S, 1] f32
        scores = scores.reshape(tb, s, 1)                            # tile-aligned split
    else:
        # Robust VPU/XLU fallback for awkward sequence lengths (not hit when
        # S is a multiple of 8).
        v_row = v_ref[:, 0].astype(jnp.float32)                      # [D]
        scores = jnp.sum(x.astype(jnp.float32) * v_row,
                         axis=2, keepdims=True)                      # [TB, S, 1] f32
    scores = jnp.tanh(scores + c)                                    # EUP

    # ---- softmax over S (sublane reductions on a tiny [TB, S, 1] tensor) -----
    m = jnp.max(scores, axis=1, keepdims=True)                       # [TB, 1, 1]
    e = jnp.exp(scores - m)
    denom = jnp.sum(e, axis=1, keepdims=True)                        # [TB, 1, 1]
    att = e / denom                                                  # exact; negligible cost

    # ---- weighted pooling on the VPU: out[b,:] = sum_s att[b,s] * x[b,s,:] ---
    att_x = att.astype(x.dtype) * x                                  # mul in x.dtype
    o_ref[...] = jnp.sum(att_x, axis=1).astype(o_ref.dtype)          # [TB, D]


def _pick_batch_tile(B, S, D, itemsize):
    """Generation-aware batch-tile pick.

    The x tile is budgeted at ~1/12 of physical VMEM so that the double-buffered
    input plus in-kernel temporaries stay well under the scoped limit on every
    generation (v7x: 64 MiB physical, v5e/v6e: 128 MiB).  When B allows it, keep
    >= 8 grid steps so DMA/compute overlap and the "parallel" batch axis can be
    sharded across v7x's two TensorCores.  Returns (tb, vmem_capacity_bytes).
    """
    try:
        vmem_cap = int(pltpu.get_tpu_info().vmem_capacity_bytes)
    except Exception:
        vmem_cap = 64 * 1024 * 1024                    # conservative default (v7x)
    tile_budget = max(vmem_cap // 12, 1 << 20)
    bytes_per_batch_row = max(S * D * itemsize, 1)
    max_tb = max(1, tile_budget // bytes_per_batch_row)

    if B < 16 and B <= max_tb:
        return B, vmem_cap                             # tiny batch: one full-extent block

    # tb must be a multiple of 8 (sublane-aligned [tb, D] output block) or B.
    tb = min(max_tb, max(8, pl.cdiv(B, 8)))
    tb = max(8, (tb // 8) * 8)
    if tb > max_tb:
        # Even one 8-row slab overflows the per-tile budget (very large S*D);
        # keep tb = 8 and raise vmem_limit_bytes for it in the wrapper rather
        # than silently overshooting like the old clamp did.
        # TODO(synk): add S-tiling (online softmax over seq chunks) for inputs
        # where an [8, S, D] slab does not fit VMEM at all.
        tb = 8
    return min(tb, B), vmem_cap


def attention_forward(x, weight, bias, representation):
    """x: [B, S, D]; weight: [D, D] nn.Linear weight ([out, in]); bias: [D];
    representation: [D, 1]. Returns [B, D]."""
    B, S, D = x.shape

    # Fold the linear projection into the score (f32, once, outside the kernel):
    #   (x @ W^T + b) . rep  =  x . (W^T rep)  +  (b . rep)
    rep = representation.reshape(D).astype(jnp.float32)
    v_col = jnp.dot(weight.astype(jnp.float32).T, rep)               # f32 fold: W^T rep
    v_col = v_col.reshape(D, 1).astype(x.dtype)                      # cast once for MXU
    c = jnp.dot(bias.astype(jnp.float32), rep).reshape(1, 1)         # f32 scalar

    tb, vmem_cap = _pick_batch_tile(B, S, D, x.dtype.itemsize)
    grid = (pl.cdiv(B, tb),)

    tile_bytes = tb * S * D * x.dtype.itemsize
    # 2 pipeline buffers for x + ~2 tile-sized in-kernel temporaries + slack,
    # capped at 75% of this generation's physical VMEM.
    vmem_limit = min(int(vmem_cap * 3 // 4),
                     max(32 * 1024 * 1024, 6 * tile_bytes + (4 << 20)))

    return pl.pallas_call(
        attention_kernel,
        out_shape=jax.ShapeDtypeStruct((B, D), x.dtype),
        grid=grid,
        in_specs=[
            pl.BlockSpec((tb, S, D), lambda i: (i, 0, 0)),           # x: tiled over batch
            pl.BlockSpec((D, 1), lambda i: (0, 0)),                  # v: tiny resident block
            pl.BlockSpec(memory_space=pltpu.MemorySpace.SMEM),       # c: scalar in SMEM
        ],
        out_specs=pl.BlockSpec((tb, D), lambda i: (i, 0)),
        compiler_params=pltpu.CompilerParams(
            dimension_semantics=("parallel",),                       # batch rows independent
            vmem_limit_bytes=int(vmem_limit),
        ),
        cost_estimate=pl.CostEstimate(
            flops=4 * B * S * D,                                     # score dot + pooling
            transcendentals=2 * B * S,                               # tanh + exp
            bytes_accessed=(B * S * D + B * D + D) * x.dtype.itemsize,
        ),
    )(x, v_col, c)


def attention_ref(x, weight, bias, representation):
    """Pure-JAX reference mirroring the PyTorch forward (unfolded)."""
    u = jnp.einsum('bsd,ed->bse', x, weight) + bias                  # nn.Linear
    scores = jnp.tanh(jnp.einsum('bsd,d->bs', u, representation[:, 0]))
    att = jax.nn.softmax(scores, axis=-1)                            # softmax over seq
    return jnp.einsum('bs,bsd->bd', att, x)                          # attention_mul


if __name__ == "__main__":
    B, S, D = 2, 8, 32
    key = jax.random.PRNGKey(0)
    kx, kw, kb, kr = jax.random.split(key, 4)

    x = jax.random.normal(kx, (B, S, D), dtype=jnp.float32)
    # Deterministic synthetic parameters (shapes from Attention.__init__):
    #   linear_project.weight [D, D], linear_project.bias [D], representation [D, 1]
    weight = jax.random.normal(kw, (D, D), dtype=jnp.float32) * (1.0 / jnp.sqrt(D))
    bias = jax.random.normal(kb, (D,), dtype=jnp.float32) * 0.1
    representation = jax.random.normal(kr, (D, 1), dtype=jnp.float32) * (1.0 / jnp.sqrt(D))

    out = jax.block_until_ready(attention_forward(x, weight, bias, representation))
    ref = attention_ref(x, weight, bias, representation)

    assert out.shape == (B, D)
    # Tolerance covers the (mathematically exact) algebraic fold re-association
    # and minor transcendental/matmul rounding differences.
    assert jnp.allclose(out, ref, atol=1e-3, rtol=1e-3), \
        "Pallas kernel mismatch vs JAX reference"
    print("KERNEL_OK")
</pallas_src>

<mosaic_0001>
module attributes {stable_mosaic.version = 11 : i64} {
  func.func @attention_kernel(%arg0: i32, %arg1: memref<2x8x32xf32, #tpu.memory_space<vmem>>, %arg2: memref<32x1xf32, #tpu.memory_space<vmem>>, %arg3: memref<1x1xf32, #tpu.memory_space<smem>>, %arg4: memref<2x32xf32, #tpu.memory_space<vmem>>) attributes {dimension_semantics = [#tpu.dimension_semantics<parallel>], iteration_bounds = array<i64: 1>, scalar_prefetch = 0 : i64, scratch_operands = 0 : i64, tpu.core_type = #tpu.core_type<tc>, window_params = [{transform_indices = @transform_0, window_bounds = array<i64: 2, 8, 32>}, {pipeline_mode = #tpu.pipeline_mode<synchronous>, transform_indices = @transform_1, window_bounds = array<i64: 32, 1>}, {transform_indices = @transform_2, window_bounds = array<i64: 1, 1>}, {transform_indices = @transform_3, window_bounds = array<i64: 2, 32>}]} {
    %c0 = arith.constant 0 : index
    %c0_0 = arith.constant 0 : index
    %c0_1 = arith.constant 0 : index
    %0 = vector.load %arg1[%c0, %c0_0, %c0_1] : memref<2x8x32xf32, #tpu.memory_space<vmem>>, vector<2x8x32xf32>
    %c0_2 = arith.constant 0 : index
    %c0_3 = arith.constant 0 : index
    %1 = memref.load %arg3[%c0_2, %c0_3] : memref<1x1xf32, #tpu.memory_space<smem>>
    %2 = vector.shape_cast %0 : vector<2x8x32xf32> to vector<16x32xf32>
    %c0_4 = arith.constant 0 : index
    %c0_5 = arith.constant 0 : index
    %3 = vector.load %arg2[%c0_4, %c0_5] : memref<32x1xf32, #tpu.memory_space<vmem>>, vector<32x1xf32>
    %cst = arith.constant dense<0.000000e+00> : vector<16x1xf32>
    %4 = tpu.matmul %2, %3, %cst {dimension_numbers = #tpu.dot_dimension_numbers<[1], [0], [0], [1], [0, 0, 1, 1], [], []>} : vector<16x32xf32>, vector<32x1xf32>, vector<16x1xf32> -> vector<16x1xf32>
    %5 = vector.shape_cast %4 : vector<16x1xf32> to vector<2x8x1xf32>
    %6 = vector.broadcast %1 : f32 to vector<2x8x1xf32>
    %7 = arith.addf %5, %6 : vector<2x8x1xf32>
    %8 = math.tanh %7 : vector<2x8x1xf32>
    %cst_6 = arith.constant dense<0xFF800000> : vector<2x1xf32>
    %9 = vector.multi_reduction <maximumf>, %8, %cst_6 [1] : vector<2x8x1xf32> to vector<2x1xf32>
    %10 = vector.shape_cast %9 : vector<2x1xf32> to vector<2x1x1xf32>
    %11 = vector.broadcast %10 : vector<2x1x1xf32> to vector<2x8x1xf32>
    %12 = arith.subf %8, %11 : vector<2x8x1xf32>
    %13 = math.exp %12 : vector<2x8x1xf32>
    %cst_7 = arith.constant dense<0.000000e+00> : vector<2x1xf32>
    %14 = vector.multi_reduction <add>, %13, %cst_7 [1] : vector<2x8x1xf32> to vector<2x1xf32>
    %15 = vector.shape_cast %14 : vector<2x1xf32> to vector<2x1x1xf32>
    %16 = vector.broadcast %15 : vector<2x1x1xf32> to vector<2x8x1xf32>
    %17 = arith.divf %13, %16 : vector<2x8x1xf32>
    %18 = vector.broadcast %17 : vector<2x8x1xf32> to vector<2x8x32xf32>
    %19 = arith.mulf %18, %0 : vector<2x8x32xf32>
    %cst_8 = arith.constant dense<0.000000e+00> : vector<2x32xf32>
    %20 = vector.multi_reduction <add>, %19, %cst_8 [1] : vector<2x8x32xf32> to vector<2x32xf32>
    %c0_9 = arith.constant 0 : index
    %c0_10 = arith.constant 0 : index
    %21 = vector.load %arg4[%c0_9, %c0_10] : memref<2x32xf32, #tpu.memory_space<vmem>>, vector<2x32xf32>
    tpu.vector_store %arg4[%c0_9, %c0_10], %20 {strides = array<i32>} : memref<2x32xf32, #tpu.memory_space<vmem>>, vector<2x32xf32>,
    return
  }
  func.func @transform_0(%arg0: i32) -> (i32, i32, i32) {
    %c0_i32 = arith.constant 0 : i32
    %c0_i32_0 = arith.constant 0 : i32
    %c0_i32_1 = arith.constant 0 : i32
    return %arg0, %c0_i32, %c0_i32_0 : i32, i32, i32
  }
  func.func @transform_1(%arg0: i32) -> (i32, i32) {
    %c0_i32 = arith.constant 0 : i32
    %c0_i32_0 = arith.constant 0 : i32
    %c0_i32_1 = arith.constant 0 : i32
    return %c0_i32, %c0_i32_0 : i32, i32
  }
  func.func @transform_2(%arg0: i32) -> (i32, i32) {
    %c0_i32 = arith.constant 0 : i32
    %c0_i32_0 = arith.constant 0 : i32
    %c0_i32_1 = arith.constant 0 : i32
    return %c0_i32, %c0_i32_0 : i32, i32
  }
  func.func @transform_3(%arg0: i32) -> (i32, i32) {
    %c0_i32 = arith.constant 0 : i32
    %c0_i32_0 = arith.constant 0 : i32
    return %arg0, %c0_i32 : i32, i32
  }
}

</mosaic_0001>

<llo_original>
// kernel: tpu_custom_call.1
$region0: #{tpu_custom_call.1}
  #allocation0 [shape = 'u32[]', space=smem, size = 0x4, offset = 0x4, fixed_abs, tag = 'smem constant byte address 0x4 - core index']
  #allocation1 [shape = 'u32[72,128]{1,0:T(1,128)}', space=vmem, size = 0x9000, scoped, tag = 'internal scratch']
  #allocation2 [shape = 'f32[1,1]{1,0:T(1,128)S(6)}', space=smem, size = 0x200, scoped, tag = 'scoped memory for tpu_custom_call.1']
  %s0 = inlined_call_operand.vmem [shape: f32[2,8,32], index: 0, kind: input, shape index: {}]
  %s1 = inlined_call_operand.vmem [shape: f32[32,1], index: 1, kind: input, shape index: {}]
  %s2 = inlined_call_operand.<no memory space> [shape: f32[1,1], index: 2, kind: input, shape index: {}]
  %s3 = inlined_call_operand.hbm [shape: f32[2,32], index: 3, kind: output, shape index: {}]
  %s4 = sld [smem:[#allocation0]]
  $region22: #{tpu_custom_call.1} parent=0
    _
  %s6 = ssub.s32 1, %s4
  %s7 = scalar_select 0, %s6, %s4
  %8 = sst [smem:[#allocation2]] %s2
  $region1: #{tpu_custom_call.1} parent=0
    #allocation3 [shape = 'u8[1024]{0}', space=vmem, size = 0x400, scoped, tag = 'output window, operand 0, single buffered']
    #allocation4 [shape = 's32[1]{0}', space=sflag, size = 0x4, scoped, tag = 'scoped memory for tpu_custom_call.1']
    %9 = vsyncpa [#allocation4], 0
    // Predicated region
    $region2: #{tpu_custom_call.1} parent=1 // pred_check
      _
    $region3: #{tpu_custom_call.1} parent=1 // pred_check_branch
      %11 = sbr.rel (0) target = $region5
    $region4: #{tpu_custom_call.1} parent=1 // pred_region
      _
    $region5: #{tpu_custom_call.1} parent=1 // pred_fallthru
      _
    // Predicated region
    $region6: #{tpu_custom_call.1} parent=1 // pred_check
      _
    $region7: #{tpu_custom_call.1} parent=1 // pred_check_branch
      %13 = sbr.rel (0) target = $region9
    $region8: #{tpu_custom_call.1} parent=1 // pred_region
      _
    $region9: #{tpu_custom_call.1} parent=1 // pred_fallthru
      _
    // Predicated region
    $region10: #{tpu_custom_call.1} parent=1 // pred_check
      _
    $region11: #{tpu_custom_call.1} parent=1 // pred_check_branch
      %15 = sbr.rel (0) target = $region13
    $region12: #{tpu_custom_call.1} parent=1 // pred_region
      _
    $region13: #{tpu_custom_call.1} parent=1 // pred_fallthru
      _
    %v16 = vld [vmem:[%s0] sm:$0xff]
    %v17 = vld [vmem:[%s0 + $0x8] sm:$0xff]
    %s18 = sld [smem:[#allocation2]]
    %v19 = vld [vmem:[%s1] sm:$0xff]
    %v20 = vld [vmem:[%s1 + $0x8] sm:$0xff]
    %v21 = vld [vmem:[%s1 + $0x10] sm:$0xff]
    %v22 = vld [vmem:[%s1 + $0x18] sm:$0xff]
    %vm23 = vcmask 261120
    %v25 = vsel %vm23, %v16, 0
    %v28 = vsel %vm23, %v17, 0
    %30 = vmatpush.msra.mxu0 0.0
    %31 = vmatpush.msra.mxu0 0.0
    %32 = vmatpush.msra.mxu0 0.0
    %33 = vmatpush.msra.mxu0 0.0
    %34 = vmatpush.msra.mxu0 0.0
    %35 = vmatpush.msra.mxu0 0.0
    %36 = vmatpush.msra.mxu0 0.0
    %37 = vmatpush.msra.mxu0 0.0
    %38 = vmatpush.msra.mxu0 0.0
    %39 = vmatpush.msra.mxu0 0.0
    %40 = vmatpush.msra.mxu0 0.0
    %41 = vmatpush.msra.mxu0 0.0
    %42 = vmatpush.msra.mxu0 %v22
    %43 = vmatpush.msra.mxu0 %v21
    %44 = vmatpush.msra.mxu0 %v20
    %45 = vmatpush.msra.mxu0 %v19
    %46 = vmatmul.f32.gmra.mxu0 %v25
    %v47 = vpop.f32.mrf.mxu0
    %v48 = vadd.f32 0.0, %v47
    %49 = vmatmul.f32.gmra.mxu0 %v28
    %v50 = vpop.f32.mrf.mxu0
    %v51 = vadd.f32 0.0, %v50
    %52 = vdwg.mxu0
    %v53 = vstv %s18
    %v54 = vadd.f32 %v48, %v53
    %v55 = vadd.f32 %v51, %v53
    %v56 = vtanh.pop %v54
    %v57 = vtanh.pop %v55
    %vm58 = vcmask 7168
    %v59 = vsel %vm58, %v56, -inf
    %v60 = vrot.slane %v59, 4
    %v61 = vmax.f32 %v59, %v60
    %v62 = vrot.slane %v61, 2
    %v63 = vmax.f32 %v61, %v62
    %v64 = vrot.slane %v63, 1
    %v65 = vmax.f32 %v63, %v64
    %v66 = vsel %vm58, %v57, -inf
    %v67 = vrot.slane %v66, 4
    %v68 = vmax.f32 %v66, %v67
    %v69 = vrot.slane %v68, 2
    %v70 = vmax.f32 %v68, %v69
    %v71 = vrot.slane %v70, 1
    %v72 = vmax.f32 %v70, %v71
    %v73 = vsub.f32 %v56, %v65
    %v74 = vsub.f32 %v57, %v72
    %v75 = vmul.f32 %v73, 1.442695
    %v76 = vpow.pop %v75
    %v77 = vmul.f32 %v74, 1.442695
    %v78 = vpow.pop %v77
    %v79 = vsel %vm58, %v76, 0.0
    %v80 = vrot.slane %v79, 4
    %v81 = vadd.f32 %v79, %v80
    %v82 = vrot.slane %v81, 2
    %v83 = vadd.f32 %v81, %v82
    %v84 = vrot.slane %v83, 1
    %v85 = vadd.f32 %v83, %v84
    %v86 = vsel %vm58, %v78, 0.0
    %v87 = vrot.slane %v86, 4
    %v88 = vadd.f32 %v86, %v87
    %v89 = vrot.slane %v88, 2
    %v90 = vadd.f32 %v88, %v89
    %v91 = vrot.slane %v90, 1
    %v92 = vadd.f32 %v90, %v91
    %v93 = vrcp.pop %v85
    %v94 = vmul.f32 %v85, %v93
    %v95 = vsub.f32 1.0, %v94
    %v96 = vmul.f32 %v93, %v95
    %v97 = vadd.f32 %v93, %v96
    %vm98 = vweird.f32 %v85
    %vm99 = vweird.f32 %v93
    %vm100 = vmor %vm98, %vm99
    %v101 = vsel %vm100, %v93, %v97
    %v102 = vand.u32 2147483647, %v85
    %vm103 = vcmp.eq.f32.partialorder %v102, 8.507059e+37
    %v104 = vand.u32 %v85, 2147483648
    %v105 = vor.u32 1.1754944e-38, %v104
    %v106 = vsel %vm103, %v105, %v101
    %v107 = vmul.f32 %v76, %v106
    %v108 = vrcp.pop %v92
    %v109 = vmul.f32 %v92, %v108
    %v110 = vsub.f32 1.0, %v109
    %v111 = vmul.f32 %v108, %v110
    %v112 = vadd.f32 %v108, %v111
    %vm113 = vweird.f32 %v92
    %vm114 = vweird.f32 %v108
    %vm115 = vmor %vm113, %vm114
    %v116 = vsel %vm115, %v108, %v112
    %v117 = vand.u32 2147483647, %v92
    %vm118 = vcmp.eq.f32.partialorder %v117, 8.507059e+37
    %v119 = vand.u32 %v92, 2147483648
    %v120 = vor.u32 1.1754944e-38, %v119
    %v121 = vsel %vm118, %v120, %v116
    %v122 = vmul.f32 %v78, %v121
    %124 = vset.pattern.permute.xlu0 0
    %125 = vperm.xlu0 %124, %v107
    %v126 = vpop.permute.xlu0 %125
    %129 = vset.pattern.permute.xlu0 0
    %130 = vperm.xlu0 %129, %v122
    %v131 = vpop.permute.xlu0 %130
    %v133 = vmul.f32 %v126, %v16
    %v134 = vmul.f32 %v131, %v17
    %v135 = vsel %vm23, %v133, 0.0
    %v136 = vrot.slane %v135, 4
    %v137 = vadd.f32 %v135, %v136
    %v138 = vrot.slane %v137, 2
    %v139 = vadd.f32 %v137, %v138
    %v140 = vrot.slane %v139, 1
    %v141 = vadd.f32 %v139, %v140
    %v142 = vsel %vm23, %v134, 0.0
    %v143 = vrot.slane %v142, 4
    %v144 = vadd.f32 %v142, %v143
    %v145 = vrot.slane %v144, 2
    %v146 = vadd.f32 %v144, %v145
    %v147 = vrot.slane %v146, 1
    %v148 = vadd.f32 %v146, %v147
    %vm151 = vcmask 1041409
    %v152 = vsel %vm151, %v148, %v141
    %vm154 = vcmask 254976
    %155 = vst.msk [vmem:[#allocation3] sm:$0x3] %vm154, %v152
    // Predicated region
    $region14: #{tpu_custom_call.1} parent=1 // pred_check
      _
    $region15: #{tpu_custom_call.1} parent=1 // pred_check_branch
      %157 = sbr.rel (0) target = $region17
    $region16: #{tpu_custom_call.1} parent=1 // pred_region
      %159 = vsyncadd [#allocation4], 0
      %s161 = sshll.u32 [#allocation3], 4
      %s162 = int_to_ptr.vmem [resolvable:$true] %s161
      %s163 = sshll.u32 %s3, 4
      %s164 = int_to_ptr.hbm [resolvable:$true] %s163
      %166 = dma.vmem_to_hbm [thread:$0]  %s162, 32, %s164, [#allocation4]
    $region17: #{tpu_custom_call.1} parent=1 // pred_fallthru
      _
    // Predicated region
    $region18: #{tpu_custom_call.1} parent=1 // pred_check
      _
    $region19: #{tpu_custom_call.1} parent=1 // pred_check_branch
      %168 = sbr.rel (0) target = $region21
    $region20: #{tpu_custom_call.1} parent=1 // pred_region
      %170 = dma.done [#allocation4], 32
    $region21: #{tpu_custom_call.1} parent=1 // pred_fallthru
      _
    %171 = vsyncpa [#allocation4], 1

</llo_original>
